<compile_context>
chip_gen: v7x
topology: tpu7x:2x2x1
jax: 0.10.0
libtpu: 0.0.40
codegen_flags: <defaults>
</compile_context>

<pallas_src>
import jax
import jax.numpy as jnp
from jax import lax
from jax.experimental import pallas as pl
from jax.experimental.pallas import tpu as pltpu

_INV_SQRT2 = 0.7071067811865476


def _round_up(x, m):
    return (x + m - 1) // m * m


def _vmem_capacity_bytes():
    """Generation-aware VMEM capacity (64 MiB v7x, 128 MiB v5e/v6e), safe fallback."""
    try:
        info = pltpu.get_tpu_info()
        cap = getattr(info, "vmem_capacity_bytes", None)
        if cap:
            return int(cap)
    except Exception:
        pass
    return 64 << 20  # conservative (v7x per-TC)


# --------------------------------------------------------------------------- #
# Kernels
# --------------------------------------------------------------------------- #
def _mlp_kernel_resident(x_ref, w1_ref, b1_ref, w2_ref, b2_ref, o_ref):
    """Weights fully resident in VMEM; one row tile per grid step.

    x_ref : (tm, C) native dtype    w1_ref: (C, H) bf16   b1_ref: (1, H) f32
    w2_ref: (H, C)  bf16            b2_ref: (1, C) f32    o_ref : (tm, C)
    """
    x = x_ref[...].astype(w1_ref.dtype)          # in-kernel cast: VPU filler, free
    h = jnp.dot(x, w1_ref[...], preferred_element_type=jnp.float32) + b1_ref[...]
    # Exact erf-GELU (PyTorch nn.GELU() default), evaluated in f32.
    h = 0.5 * h * (1.0 + lax.erf(h * _INV_SQRT2))
    y = jnp.dot(h.astype(w2_ref.dtype), w2_ref[...],
                preferred_element_type=jnp.float32)
    # dropout: inference mode -> identity.
    # TODO(synk): training-mode dropout would use pltpu.prng_seed / prng_random_bits.
    o_ref[...] = (y + b2_ref[...]).astype(o_ref.dtype)


def _mlp_kernel_stream(x_ref, w1_ref, b1_ref, w2_ref, b2_ref, o_ref, acc_ref):
    """Weight-streaming fallback: (row-tile i, hidden-tile k) reduction grid.

    x_ref : (tm, C) native dtype   w1_ref: (C, tH) bf16 (contiguous slab)
    b1_ref: (1, tH) f32            w2_ref: (tH, C) bf16   b2_ref: (1, C) f32
    o_ref : (tm, C)                acc_ref: (tm, C) f32 VMEM accumulator
    """
    k = pl.program_id(1)

    @pl.when(k == 0)
    def _():
        acc_ref[...] = jnp.zeros_like(acc_ref)

    x = x_ref[...].astype(w1_ref.dtype)
    h = jnp.dot(x, w1_ref[...], preferred_element_type=jnp.float32) + b1_ref[...]
    h = 0.5 * h * (1.0 + lax.erf(h * _INV_SQRT2))
    acc_ref[...] += jnp.dot(h.astype(w2_ref.dtype), w2_ref[...],
                            preferred_element_type=jnp.float32)

    @pl.when(k == pl.num_programs(1) - 1)
    def _():
        # dropout: inference mode -> identity.
        o_ref[...] = (acc_ref[...] + b2_ref[...]).astype(o_ref.dtype)


# --------------------------------------------------------------------------- #
# Parameter preparation (once, at load time)
# --------------------------------------------------------------------------- #
def prepare_mlp_params(w1, b1, w2, b2, *, compute_dtype=jnp.bfloat16, th=None):
    """Transpose + cast PyTorch nn.Linear weights ONCE.

    w1: (4C, C)  b1: (4C,)  w2: (C, 4C)  b2: (C,)   (PyTorch layout)
    Also stores a (H//th, C, th) copy of W1^T so a streamed slab is contiguous.
    """
    H, C = w1.shape
    if th is None:
        th = H
        for cand in (512, 256, 128):
            if H % cand == 0:
                th = cand
                break
    w1t = jnp.asarray(w1, jnp.float32).T.astype(compute_dtype)          # (C, H)
    kt = H // th
    # Contiguous slab layout: w1t_tiled[k] == w1t[:, k*th:(k+1)*th]  -> one big DMA.
    w1t_tiled = w1t.reshape(C, kt, th).transpose(1, 0, 2)               # (kt, C, th)
    return dict(
        w1t=w1t,
        w1t_tiled=w1t_tiled,
        th=th,
        b1=jnp.asarray(b1, jnp.float32).reshape(1, H),
        w2t=jnp.asarray(w2, jnp.float32).T.astype(compute_dtype),       # (H, C)
        b2=jnp.asarray(b2, jnp.float32).reshape(1, C),
    )


# --------------------------------------------------------------------------- #
# Wrapper
# --------------------------------------------------------------------------- #
def mlp_pallas(x, params, *, tm=None, weights_resident=None):
    """x: [B, T, C]; params from prepare_mlp_params. Returns [B, T, C] in x.dtype."""
    B, T, C = x.shape
    w1t, w1t_tiled, th = params["w1t"], params["w1t_tiled"], params["th"]
    b1, w2t, b2 = params["b1"], params["w2t"], params["b2"]
    H = w1t.shape[1]
    out_dtype = x.dtype
    M = B * T

    cbytes = jnp.dtype(w1t.dtype).itemsize
    xbytes = jnp.dtype(x.dtype).itemsize
    obytes = jnp.dtype(out_dtype).itemsize

    vmem_budget = int(_vmem_capacity_bytes() * 0.85)

    def resident_fp(tm_):
        return (2 * 2 * C * H * cbytes                 # W1^T + W2^T (conservative 2x)
                + 2 * tm_ * C * (xbytes + obytes)      # x tile + out tile (2 bufs each)
                + tm_ * H * (4 + cbytes)               # f32 GELU intermediate + bf16 copy
                + 2 * (H + C) * 4)                     # biases

    def stream_fp(tm_):
        return (2 * 2 * C * th * cbytes                # W1^T / W2^T slabs (2 bufs each)
                + 2 * tm_ * C * (xbytes + obytes)      # x tile + out tile
                + tm_ * C * 4                          # f32 accumulator
                + tm_ * th * (4 + cbytes)              # GELU intermediate
                + 2 * (th + C) * 4)

    probe_tm = min(256, _round_up(M, 16))
    if weights_resident is None:
        weights_resident = resident_fp(probe_tm) <= vmem_budget

    if tm is None:
        if M <= 256:
            tm = _round_up(M, 16)       # single tile, minimal padding
        else:
            # Large M: bigger row tiles amortize weight traffic (streaming regime),
            # but keep >= 2 row tiles so v7x's two TensorCores both get work.
            tm = 256
            max_tm = 512 if weights_resident else 1024
            for cand in (512, 1024):
                if cand <= max_tm and M >= 2 * cand:
                    tm = cand

    fp_fn = resident_fp if weights_resident else stream_fp
    while tm > probe_tm and fp_fn(tm) > vmem_budget:
        tm = max(tm // 2, probe_tm)
    if weights_resident and fp_fn(tm) > vmem_budget:
        weights_resident = False        # weights too big for VMEM -> stream slabs
        fp_fn = stream_fp

    M_pad = _round_up(M, tm)
    x2 = x.reshape(M, C)                # native dtype; cast happens in-kernel
    if M_pad != M:
        x2 = jnp.pad(x2, ((0, M_pad - M), (0, 0)))  # padded rows sliced off below

    est = fp_fn(tm)
    vmem_limit = int(min(max(2 * est + (8 << 20), 16 << 20), vmem_budget))

    if weights_resident:
        grid = (M_pad // tm,)
        out2 = pl.pallas_call(
            _mlp_kernel_resident,
            out_shape=jax.ShapeDtypeStruct((M_pad, C), out_dtype),
            grid_spec=pltpu.PrefetchScalarGridSpec(
                num_scalar_prefetch=0,
                grid=grid,
                in_specs=[
                    pl.BlockSpec((tm, C), lambda i: (i, 0)),   # x rows (native dtype)
                    pl.BlockSpec((C, H), lambda i: (0, 0)),    # W1^T fully resident
                    pl.BlockSpec((1, H), lambda i: (0, 0)),    # b1
                    pl.BlockSpec((H, C), lambda i: (0, 0)),    # W2^T fully resident
                    pl.BlockSpec((1, C), lambda i: (0, 0)),    # b2
                ],
                out_specs=pl.BlockSpec((tm, C), lambda i: (i, 0)),
            ),
            compiler_params=pltpu.CompilerParams(
                dimension_semantics=("parallel",),
                vmem_limit_bytes=vmem_limit,
            ),
        )(x2, w1t, b1, w2t, b2)
    else:
        kt = H // th
        grid = (M_pad // tm, kt)        # reduction axis last
        out2 = pl.pallas_call(
            _mlp_kernel_stream,
            out_shape=jax.ShapeDtypeStruct((M_pad, C), out_dtype),
            grid_spec=pltpu.PrefetchScalarGridSpec(
                num_scalar_prefetch=0,
                grid=grid,
                in_specs=[
                    pl.BlockSpec((tm, C), lambda i, k: (i, 0)),                    # x rows
                    pl.BlockSpec((pl.Squeezed(), C, th), lambda i, k: (k, 0, 0)),  # W1^T slab (contiguous)
                    pl.BlockSpec((1, th), lambda i, k: (0, k)),                    # b1 slice
                    pl.BlockSpec((th, C), lambda i, k: (k, 0)),                    # W2^T slab
                    pl.BlockSpec((1, C), lambda i, k: (0, 0)),                     # b2
                ],
                out_specs=pl.BlockSpec((tm, C), lambda i, k: (i, 0)),
                scratch_shapes=[pltpu.VMEM((tm, C), jnp.float32)],
            ),
            compiler_params=pltpu.CompilerParams(
                dimension_semantics=("parallel", "arbitrary"),
                vmem_limit_bytes=vmem_limit,
            ),
        )(x2, w1t_tiled, b1, w2t, b2)

    return out2[:M].reshape(B, T, C)


def mlp_reference(x, w1, b1, w2, b2):
    h = jnp.einsum("btc,hc->bth", x, w1) + b1
    h = 0.5 * h * (1.0 + lax.erf(h * _INV_SQRT2))
    return jnp.einsum("bth,ch->btc", h, w2) + b2


if __name__ == "__main__":
    # Small shapes implied by MLP(n_embeddings): x is [batch, seq, n_embeddings].
    B, T, C = 2, 8, 32
    H = 4 * C

    key = jax.random.PRNGKey(0)
    kx, k1, k2, k3, k4, kx2 = jax.random.split(key, 6)

    x = jax.random.normal(kx, (B, T, C), dtype=jnp.float32)

    # Deterministic parameter init (PyTorch nn.Linear-style uniform ranges).
    bound1 = 1.0 / jnp.sqrt(C)
    bound2 = 1.0 / jnp.sqrt(H)
    w1 = jax.random.uniform(k1, (H, C), jnp.float32, -bound1, bound1)  # c_fc.weight
    b1 = jax.random.uniform(k2, (H,),   jnp.float32, -bound1, bound1)  # c_fc.bias
    w2 = jax.random.uniform(k3, (C, H), jnp.float32, -bound2, bound2)  # c_proj.weight
    b2 = jax.random.uniform(k4, (C,),   jnp.float32, -bound2, bound2)  # c_proj.bias

    params = prepare_mlp_params(w1, b1, w2, b2)   # transpose + bf16 cast, once
    y_ref = mlp_reference(x, w1, b1, w2, b2)

    # 1) Default path: weights resident in VMEM at this scale.
    y = jax.block_until_ready(mlp_pallas(x, params))
    assert y.shape == (B, T, C)
    assert jnp.allclose(y, y_ref, atol=3e-2, rtol=3e-2), (
        "resident path mismatch, max abs diff = "
        f"{float(jnp.max(jnp.abs(y - y_ref)))}")

    # 2) Forced weight-streaming path (exercises the reduction-grid kernel).
    y_s = jax.block_until_ready(mlp_pallas(x, params, weights_resident=False))
    assert jnp.allclose(y_s, y_ref, atol=3e-2, rtol=3e-2), (
        "streaming path mismatch, max abs diff = "
        f"{float(jnp.max(jnp.abs(y_s - y_ref)))}")

    # 3) Padded-rows path (M not a multiple of the row tile).
    x_odd = jax.random.normal(kx2, (2, 7, C), dtype=jnp.float32)
    y_odd = jax.block_until_ready(mlp_pallas(x_odd, params))
    y_odd_ref = mlp_reference(x_odd, w1, b1, w2, b2)
    assert jnp.allclose(y_odd, y_odd_ref, atol=3e-2, rtol=3e-2), (
        "padded path mismatch, max abs diff = "
        f"{float(jnp.max(jnp.abs(y_odd - y_odd_ref)))}")

    print("KERNEL_OK")
</pallas_src>

<mosaic_0001>
module attributes {stable_mosaic.version = 11 : i64} {
  func.func @_mlp_kernel_resident(%arg0: i32, %arg1: memref<16x32xf32, #tpu.memory_space<vmem>>, %arg2: memref<32x128xbf16, #tpu.memory_space<vmem>>, %arg3: memref<1x128xf32, #tpu.memory_space<vmem>>, %arg4: memref<128x32xbf16, #tpu.memory_space<vmem>>, %arg5: memref<1x32xf32, #tpu.memory_space<vmem>>, %arg6: memref<16x32xf32, #tpu.memory_space<vmem>>) attributes {dimension_semantics = [#tpu.dimension_semantics<parallel>], iteration_bounds = array<i64: 1>, scalar_prefetch = 0 : i64, scratch_operands = 0 : i64, tpu.core_type = #tpu.core_type<tc>, window_params = [{transform_indices = @transform_0, window_bounds = array<i64: 16, 32>}, {pipeline_mode = #tpu.pipeline_mode<synchronous>, transform_indices = @transform_1, window_bounds = array<i64: 32, 128>}, {pipeline_mode = #tpu.pipeline_mode<synchronous>, transform_indices = @transform_2, window_bounds = array<i64: 1, 128>}, {pipeline_mode = #tpu.pipeline_mode<synchronous>, transform_indices = @transform_3, window_bounds = array<i64: 128, 32>}, {pipeline_mode = #tpu.pipeline_mode<synchronous>, transform_indices = @transform_4, window_bounds = array<i64: 1, 32>}, {transform_indices = @transform_5, window_bounds = array<i64: 16, 32>}]} {
    %c0 = arith.constant 0 : index
    %c0_0 = arith.constant 0 : index
    %0 = vector.load %arg1[%c0, %c0_0] : memref<16x32xf32, #tpu.memory_space<vmem>>, vector<16x32xf32>
    %1 = arith.truncf %0 : vector<16x32xf32> to vector<16x32xbf16>
    %c0_1 = arith.constant 0 : index
    %c0_2 = arith.constant 0 : index
    %2 = vector.load %arg2[%c0_1, %c0_2] : memref<32x128xbf16, #tpu.memory_space<vmem>>, vector<32x128xbf16>
    %cst = arith.constant dense<0.000000e+00> : vector<16x128xf32>
    %3 = tpu.matmul %1, %2, %cst {dimension_numbers = #tpu.dot_dimension_numbers<[1], [0], [0], [1], [0, 0, 1, 1], [], []>} : vector<16x32xbf16>, vector<32x128xbf16>, vector<16x128xf32> -> vector<16x128xf32>
    %c0_3 = arith.constant 0 : index
    %c0_4 = arith.constant 0 : index
    %4 = vector.load %arg3[%c0_3, %c0_4] : memref<1x128xf32, #tpu.memory_space<vmem>>, vector<1x128xf32>
    %5 = vector.broadcast %4 : vector<1x128xf32> to vector<16x128xf32>
    %6 = arith.addf %3, %5 : vector<16x128xf32>
    %cst_5 = arith.constant 5.000000e-01 : f32
    %7 = vector.broadcast %cst_5 : f32 to vector<16x128xf32>
    %8 = arith.mulf %7, %6 : vector<16x128xf32>
    %cst_6 = arith.constant 0.707106769 : f32
    %9 = vector.broadcast %cst_6 : f32 to vector<16x128xf32>
    %10 = arith.mulf %6, %9 : vector<16x128xf32>
    %11 = math.erf %10 : vector<16x128xf32>
    %cst_7 = arith.constant 1.000000e+00 : f32
    %12 = vector.broadcast %cst_7 : f32 to vector<16x128xf32>
    %13 = arith.addf %12, %11 : vector<16x128xf32>
    %14 = arith.mulf %8, %13 : vector<16x128xf32>
    %15 = arith.truncf %14 : vector<16x128xf32> to vector<16x128xbf16>
    %c0_8 = arith.constant 0 : index
    %c0_9 = arith.constant 0 : index
    %16 = vector.load %arg4[%c0_8, %c0_9] : memref<128x32xbf16, #tpu.memory_space<vmem>>, vector<128x32xbf16>
    %cst_10 = arith.constant dense<0.000000e+00> : vector<16x32xf32>
    %17 = tpu.matmul %15, %16, %cst_10 {dimension_numbers = #tpu.dot_dimension_numbers<[1], [0], [0], [1], [0, 0, 1, 1], [], []>} : vector<16x128xbf16>, vector<128x32xbf16>, vector<16x32xf32> -> vector<16x32xf32>
    %c0_11 = arith.constant 0 : index
    %c0_12 = arith.constant 0 : index
    %18 = vector.load %arg5[%c0_11, %c0_12] : memref<1x32xf32, #tpu.memory_space<vmem>>, vector<1x32xf32>
    %19 = vector.broadcast %18 : vector<1x32xf32> to vector<16x32xf32>
    %20 = arith.addf %17, %19 : vector<16x32xf32>
    %c0_13 = arith.constant 0 : index
    %c0_14 = arith.constant 0 : index
    %21 = vector.load %arg6[%c0_13, %c0_14] : memref<16x32xf32, #tpu.memory_space<vmem>>, vector<16x32xf32>
    tpu.vector_store %arg6[%c0_13, %c0_14], %20 {strides = array<i32>} : memref<16x32xf32, #tpu.memory_space<vmem>>, vector<16x32xf32>,
    return
  }
  func.func @transform_0(%arg0: i32) -> (i32, i32) {
    %c0_i32 = arith.constant 0 : i32
    %c0_i32_0 = arith.constant 0 : i32
    return %arg0, %c0_i32 : i32, i32
  }
  func.func @transform_1(%arg0: i32) -> (i32, i32) {
    %c0_i32 = arith.constant 0 : i32
    %c0_i32_0 = arith.constant 0 : i32
    %c0_i32_1 = arith.constant 0 : i32
    return %c0_i32, %c0_i32_0 : i32, i32
  }
  func.func @transform_2(%arg0: i32) -> (i32, i32) {
    %c0_i32 = arith.constant 0 : i32
    %c0_i32_0 = arith.constant 0 : i32
    %c0_i32_1 = arith.constant 0 : i32
    return %c0_i32, %c0_i32_0 : i32, i32
  }
  func.func @transform_3(%arg0: i32) -> (i32, i32) {
    %c0_i32 = arith.constant 0 : i32
    %c0_i32_0 = arith.constant 0 : i32
    %c0_i32_1 = arith.constant 0 : i32
    return %c0_i32, %c0_i32_0 : i32, i32
  }
  func.func @transform_4(%arg0: i32) -> (i32, i32) {
    %c0_i32 = arith.constant 0 : i32
    %c0_i32_0 = arith.constant 0 : i32
    %c0_i32_1 = arith.constant 0 : i32
    return %c0_i32, %c0_i32_0 : i32, i32
  }
  func.func @transform_5(%arg0: i32) -> (i32, i32) {
    %c0_i32 = arith.constant 0 : i32
    %c0_i32_0 = arith.constant 0 : i32
    return %arg0, %c0_i32 : i32, i32
  }
}

</mosaic_0001>

<llo_original>
// kernel: tpu_custom_call.1
$region0: #{tpu_custom_call.1}
  #allocation0 [shape = 'u32[]', space=smem, size = 0x4, offset = 0x4, fixed_abs, tag = 'smem constant byte address 0x4 - core index']
  #allocation1 [shape = 'u32[144,128]{1,0:T(1,128)}', space=vmem, size = 0x12000, scoped, tag = 'internal scratch']
  %s0 = inlined_call_operand.vmem [shape: f32[16,32], index: 0, kind: input, shape index: {}]
  %s1 = inlined_call_operand.vmem [shape: bf16[32,128], index: 1, kind: input, shape index: {}]
  %s2 = inlined_call_operand.vmem [shape: f32[1,128], index: 2, kind: input, shape index: {}]
  %s3 = inlined_call_operand.vmem [shape: bf16[128,32], index: 3, kind: input, shape index: {}]
  %s4 = inlined_call_operand.vmem [shape: f32[1,32], index: 4, kind: input, shape index: {}]
  %s5 = inlined_call_operand.hbm [shape: f32[16,32], index: 5, kind: output, shape index: {}]
  %s6 = sld [smem:[#allocation0]]
  $region30: #{tpu_custom_call.1} parent=0
    _
  %s8 = ssub.s32 1, %s6
  %s9 = scalar_select 0, %s8, %s6
  $region1: #{tpu_custom_call.1} parent=0
    #allocation2 [shape = 'u8[8192]{0}', space=vmem, size = 0x2000, scoped, tag = 'output window, operand 0, single buffered']
    #allocation3 [shape = 's32[1]{0}', space=sflag, size = 0x4, scoped, tag = 'scoped memory for tpu_custom_call.1']
    %10 = vsyncpa [#allocation3], 0
    // Predicated region
    $region2: #{tpu_custom_call.1} parent=1 // pred_check
      _
    $region3: #{tpu_custom_call.1} parent=1 // pred_check_branch
      %12 = sbr.rel (0) target = $region5
    $region4: #{tpu_custom_call.1} parent=1 // pred_region
      _
    $region5: #{tpu_custom_call.1} parent=1 // pred_fallthru
      _
    // Predicated region
    $region6: #{tpu_custom_call.1} parent=1 // pred_check
      _
    $region7: #{tpu_custom_call.1} parent=1 // pred_check_branch
      %14 = sbr.rel (0) target = $region9
    $region8: #{tpu_custom_call.1} parent=1 // pred_region
      _
    $region9: #{tpu_custom_call.1} parent=1 // pred_fallthru
      _
    // Predicated region
    $region10: #{tpu_custom_call.1} parent=1 // pred_check
      _
    $region11: #{tpu_custom_call.1} parent=1 // pred_check_branch
      %16 = sbr.rel (0) target = $region13
    $region12: #{tpu_custom_call.1} parent=1 // pred_region
      _
    $region13: #{tpu_custom_call.1} parent=1 // pred_fallthru
      _
    // Predicated region
    $region14: #{tpu_custom_call.1} parent=1 // pred_check
      _
    $region15: #{tpu_custom_call.1} parent=1 // pred_check_branch
      %18 = sbr.rel (0) target = $region17
    $region16: #{tpu_custom_call.1} parent=1 // pred_region
      _
    $region17: #{tpu_custom_call.1} parent=1 // pred_fallthru
      _
    // Predicated region
    $region18: #{tpu_custom_call.1} parent=1 // pred_check
      _
    $region19: #{tpu_custom_call.1} parent=1 // pred_check_branch
      %20 = sbr.rel (0) target = $region21
    $region20: #{tpu_custom_call.1} parent=1 // pred_region
      _
    $region21: #{tpu_custom_call.1} parent=1 // pred_fallthru
      _
    %v22 = vld [vmem:[%s0] sm:$0xff]
    %v23 = vld [vmem:[%s0 + $0x8] sm:$0xff]
    %v24 = vpack.c.bf16 %v23, %v22
    %v25 = vld [vmem:[%s1] sm:$0xf]
    %v26 = vld [vmem:[%s1 + $0x4] sm:$0xf]
    %v27 = vld [vmem:[%s1 + $0x8] sm:$0xf]
    %v28 = vld [vmem:[%s1 + $0xc] sm:$0xf]
    %v29 = vld [vmem:[%s2] sm:$0x1]
    %v31 = vlaneseq
    %v32 = vshrl.u32 %v31, 7
    %v33 = vsub.s32 0, %v32
    %v34 = vrot.slane %v29, %v33
    %v40 = vunpack.c.l.b16 %v25
    %v41 = vunpack.c.l.b16 %v26
    %v42 = vunpack.c.l.b16 %v27
    %v43 = vunpack.c.l.b16 %v28
    %v44 = vpack.c.b16 %v41, %v40
    %v45 = vpack.c.b16 %v43, %v42
    %vm48 = vcmask 261120
    %v50 = vsel %vm48, %v24, 0
    %52 = vmatprep.subr.bf16.mxu0 0
    %53 = vmatpush1.bf16.msra.mxu0 %v44
    %54 = vmatprep.subr.bf16.mxu0 0
    %55 = vmatpush1.bf16.msra.mxu0 %v45
    %56 = vmatprep.subr.bf16.mxu0 0
    %57 = vmatpush1.bf16.msra.mxu0 0
    %58 = vmatprep.subr.bf16.mxu0 0
    %59 = vmatpush1.bf16.msra.mxu0 0
    %60 = vmatprep.subr.bf16.mxu0 0
    %61 = vmatpush1.bf16.msra.mxu0 0
    %62 = vmatprep.subr.bf16.mxu0 0
    %63 = vmatpush1.bf16.msra.mxu0 0
    %64 = vmatprep.subr.bf16.mxu0 0
    %65 = vmatpush1.bf16.msra.mxu0 0
    %66 = vmatprep.subr.bf16.mxu0 0
    %67 = vmatpush1.bf16.msra.mxu0 0
    %68 = vmatprep.subr.bf16.mxu0 0
    %69 = vmatpush1.bf16.msra.mxu0 0
    %70 = vmatprep.subr.bf16.mxu0 0
    %71 = vmatpush1.bf16.msra.mxu0 0
    %72 = vmatprep.subr.bf16.mxu0 0
    %73 = vmatpush1.bf16.msra.mxu0 0
    %74 = vmatprep.subr.bf16.mxu0 0
    %75 = vmatpush1.bf16.msra.mxu0 0
    %76 = vmatprep.subr.bf16.mxu0 0
    %77 = vmatpush1.bf16.msra.mxu0 0
    %78 = vmatprep.subr.bf16.mxu0 0
    %79 = vmatpush1.bf16.msra.mxu0 0
    %80 = vmatprep.subr.bf16.mxu0 0
    %81 = vmatpush1.bf16.msra.mxu0 0
    %82 = vmatprep.subr.bf16.mxu0 0
    %83 = vmatpush1.bf16.msra.mxu0 0
    %84 = vmatprep.mubr.bf16.mxu0 0
    %85 = vmatmul.mubr.bf16.gmra.mrb[0].mxu0 %v50
    %v86 = vpop.f32.mrb[0].mxu0
    %v87 = vadd.f32 %v34, %v86
    %v88 = vpop.f32.mrb[0].mxu0
    %v89 = vpop.f32.mrb[0].mxu0
    %v90 = vadd.f32 %v34, %v89
    %v91 = vpop.f32.mrb[0].mxu0
    %92 = vdwg.mxu0
    %v93 = vmul.f32 %v87, 0.5
    %v94 = vmul.f32 %v90, 0.5
    %v95 = vmul.f32 %v87, 0.70710677
    %v96 = vmul.f32 %v90, 0.70710677
    %v97 = verf.f32.pop %v95
    %v98 = verf.f32.pop %v96
    %v99 = vadd.f32 %v97, 1.0
    %v100 = vadd.f32 %v98, 1.0
    %v101 = vmul.f32 %v93, %v99
    %v102 = vmul.f32 %v94, %v100
    %v103 = vpack.c.bf16 %v102, %v101
    %v104 = vld [vmem:[%s3] sm:$0xf]
    %v105 = vld [vmem:[%s3 + $0x4] sm:$0xf]
    %v106 = vld [vmem:[%s3 + $0x8] sm:$0xf]
    %v107 = vld [vmem:[%s3 + $0xc] sm:$0xf]
    %v108 = vld [vmem:[%s3 + $0x10] sm:$0xf]
    %v109 = vld [vmem:[%s3 + $0x14] sm:$0xf]
    %v110 = vld [vmem:[%s3 + $0x18] sm:$0xf]
    %v111 = vld [vmem:[%s3 + $0x1c] sm:$0xf]
    %v112 = vld [vmem:[%s3 + $0x20] sm:$0xf]
    %v113 = vld [vmem:[%s3 + $0x24] sm:$0xf]
    %v114 = vld [vmem:[%s3 + $0x28] sm:$0xf]
    %v115 = vld [vmem:[%s3 + $0x2c] sm:$0xf]
    %v116 = vld [vmem:[%s3 + $0x30] sm:$0xf]
    %v117 = vld [vmem:[%s3 + $0x34] sm:$0xf]
    %v118 = vld [vmem:[%s3 + $0x38] sm:$0xf]
    %v119 = vld [vmem:[%s3 + $0x3c] sm:$0xf]
    %v120 = vld [vmem:[%s4] sm:$0x1]
    %v122 = vlaneseq
    %v123 = vshrl.u32 %v122, 7
    %v124 = vsub.s32 0, %v123
    %v125 = vrot.slane %v120, %v124
    %v143 = vunpack.c.l.b16 %v104
    %v144 = vunpack.c.l.b16 %v105
    %v145 = vunpack.c.l.b16 %v106
    %v146 = vunpack.c.l.b16 %v107
    %v147 = vunpack.c.l.b16 %v108
    %v148 = vunpack.c.l.b16 %v109
    %v149 = vunpack.c.l.b16 %v110
    %v150 = vunpack.c.l.b16 %v111
    %v151 = vunpack.c.l.b16 %v112
    %v152 = vunpack.c.l.b16 %v113
    %v153 = vunpack.c.l.b16 %v114
    %v154 = vunpack.c.l.b16 %v115
    %v155 = vunpack.c.l.b16 %v116
    %v156 = vunpack.c.l.b16 %v117
    %v157 = vunpack.c.l.b16 %v118
    %v158 = vunpack.c.l.b16 %v119
    %v159 = vpack.c.b16 %v144, %v143
    %v160 = vpack.c.b16 %v146, %v145
    %v161 = vpack.c.b16 %v148, %v147
    %v162 = vpack.c.b16 %v150, %v149
    %v163 = vpack.c.b16 %v152, %v151
    %v164 = vpack.c.b16 %v154, %v153
    %v165 = vpack.c.b16 %v156, %v155
    %v166 = vpack.c.b16 %v158, %v157
    %175 = vmatprep.subr.bf16.mxu0 0
    %176 = vmatpush1.bf16.msra.mxu0 %v159
    %177 = vmatprep.subr.bf16.mxu0 0
    %178 = vmatpush1.bf16.msra.mxu0 %v160
    %179 = vmatprep.subr.bf16.mxu0 0
    %180 = vmatpush1.bf16.msra.mxu0 %v161
    %181 = vmatprep.subr.bf16.mxu0 0
    %182 = vmatpush1.bf16.msra.mxu0 %v162
    %183 = vmatprep.subr.bf16.mxu0 0
    %184 = vmatpush1.bf16.msra.mxu0 %v163
    %185 = vmatprep.subr.bf16.mxu0 0
    %186 = vmatpush1.bf16.msra.mxu0 %v164
    %187 = vmatprep.subr.bf16.mxu0 0
    %188 = vmatpush1.bf16.msra.mxu0 %v165
    %189 = vmatprep.subr.bf16.mxu0 0
    %190 = vmatpush1.bf16.msra.mxu0 %v166
    %191 = vmatprep.subr.bf16.mxu0 0
    %192 = vmatpush1.bf16.msra.mxu0 0
    %193 = vmatprep.subr.bf16.mxu0 0
    %194 = vmatpush1.bf16.msra.mxu0 0
    %195 = vmatprep.subr.bf16.mxu0 0
    %196 = vmatpush1.bf16.msra.mxu0 0
    %197 = vmatprep.subr.bf16.mxu0 0
    %198 = vmatpush1.bf16.msra.mxu0 0
    %199 = vmatprep.subr.bf16.mxu0 0
    %200 = vmatpush1.bf16.msra.mxu0 0
    %201 = vmatprep.subr.bf16.mxu0 0
    %202 = vmatpush1.bf16.msra.mxu0 0
    %203 = vmatprep.subr.bf16.mxu0 0
    %204 = vmatpush1.bf16.msra.mxu0 0
    %205 = vmatprep.subr.bf16.mxu0 0
    %206 = vmatpush1.bf16.msra.mxu0 0
    %207 = vmatprep.mubr.bf16.mxu0 0
    %208 = vmatmul.mubr.bf16.gmra.mrb[0].mxu0 %v103
    %v209 = vpop.f32.mrb[0].mxu0
    %v210 = vadd.f32 %v125, %v209
    %v211 = vpop.f32.mrb[0].mxu0
    %v212 = vpop.f32.mrb[0].mxu0
    %v213 = vadd.f32 %v125, %v212
    %v214 = vpop.f32.mrb[0].mxu0
    %215 = vdwg.mxu0
    %216 = vst.msk [vmem:[#allocation2] sm:$0xff] %vm48, %v210
    %217 = vst.msk [vmem:[#allocation2 + $0x8] sm:$0xff] %vm48, %v213
    // Predicated region
    $region22: #{tpu_custom_call.1} parent=1 // pred_check
      _
    $region23: #{tpu_custom_call.1} parent=1 // pred_check_branch
      %219 = sbr.rel (0) target = $region25
    $region24: #{tpu_custom_call.1} parent=1 // pred_region
      %s221 = ssub.s32 256, 256
      %222 = vsyncadd [#allocation3], %s221
      %s223 = sshll.u32 [#allocation2], 4
      %s224 = int_to_ptr.vmem [resolvable:$true] %s223
      %229 = dma.vmem_to_hbm [thread:$0]  %s224, 256, %s5, [#allocation3], 128, 128, 8
    $region25: #{tpu_custom_call.1} parent=1 // pred_fallthru
      _
    // Predicated region
    $region26: #{tpu_custom_call.1} parent=1 // pred_check
      _
    $region27: #{tpu_custom_call.1} parent=1 // pred_check_branch
      %231 = sbr.rel (0) target = $region29
    $region28: #{tpu_custom_call.1} parent=1 // pred_region
      %232 = dma.done [#allocation3], 256
    $region29: #{tpu_custom_call.1} parent=1 // pred_fallthru
      _
    %233 = vsyncpa [#allocation3], 1

</llo_original>
